<compile_context>
chip_gen: v5e
topology: v5e:2x2
jax: 0.10.0
libtpu: 0.0.40
codegen_flags: <defaults>
</compile_context>

<pallas_src>
import jax
import jax.numpy as jnp
from jax.experimental import pallas as pl
from jax.experimental.pallas import tpu as pltpu


def _lstm_step_kernel(xh_ref, c_ref, wg_ref, bg_ref, wh_ref, bh_ref, out_ref):
    """Fused LSTM cell step.

    xh_ref : [B, I+H]   concatenated (input, hidden_state)
    c_ref  : [B, H]     cell_state
    wg_ref : [I+H, 4H]  packed gate weights, column bands [f | i | c | o]
    bg_ref : [1, 4H]    packed gate biases
    wh_ref : [H, O]     output projection
    bh_ref : [1, O]     output bias
    out_ref: [B, W]     packed slab: [log_probs(O) | h_new(H) | c_new(H) | 0-pad]
    """
    B, H = c_ref.shape
    O = wh_ref.shape[1]

    xh = xh_ref[...]
    c_prev = c_ref[...]

    # --- (1)+(2) single lane-dense gate matmul: [B, I+H] @ [I+H, 4H] ---------
    z = (
        jnp.dot(xh, wg_ref[...], preferred_element_type=jnp.float32)
        + bg_ref[...]
    )

    # --- (3) packed nonlinearity on the full [B, 4H] vreg --------------------
    # Band layout along lanes: [0,H)=f, [H,2H)=i, [2H,3H)=c~, [3H,4H)=o.
    lane = jax.lax.broadcasted_iota(jnp.int32, z.shape, 1)
    is_c_band = jnp.logical_and(lane >= 2 * H, lane < 3 * H)
    g = jnp.where(is_c_band, jnp.tanh(z), jax.nn.sigmoid(z))

    # Static 32-lane band slices of the packed gates.
    f_gate = g[:, 0 * H:1 * H]
    i_gate = g[:, 1 * H:2 * H]
    c_tilde = g[:, 2 * H:3 * H]
    o_gate = g[:, 3 * H:4 * H]

    c_new = f_gate * c_prev + i_gate * c_tilde
    h_new = o_gate * jnp.tanh(c_new)

    # --- output projection + numerically-stable LogSoftmax (dim=1) -----------
    logits = (
        jnp.dot(h_new, wh_ref[...], preferred_element_type=jnp.float32)
        + bh_ref[...]
    )
    m = jnp.max(logits, axis=1, keepdims=True)
    shifted = logits - m
    lse = jnp.log(jnp.sum(jnp.exp(shifted), axis=1, keepdims=True))
    log_probs = shifted - lse

    # --- (5) single lane-dense packed output slab -----------------------------
    slab_w = out_ref.shape[1]
    pad = slab_w - (O + 2 * H)
    pieces = [log_probs, h_new, c_new]
    if pad > 0:
        pieces.append(jnp.zeros((B, pad), jnp.float32))
    out_ref[...] = jnp.concatenate(pieces, axis=1)


def pack_lstm_params(params):
    """One-time packing of the raw per-gate parameters (do this at init)."""
    H = params["U_f"].shape[0]
    O = params["W_h"].shape[1]
    w_gates = jnp.concatenate(
        [
            jnp.concatenate(
                [params["W_f"], params["W_i"], params["W_c"], params["W_o"]],
                axis=1),
            jnp.concatenate(
                [params["U_f"], params["U_i"], params["U_c"], params["U_o"]],
                axis=1),
        ],
        axis=0,
    )  # [(I+H), 4H]
    b_gates = jnp.concatenate(
        [params["b_f"], params["b_i"], params["b_c"], params["b_o"]]
    ).reshape(1, 4 * H)
    return {
        "w_gates": w_gates,
        "b_gates": b_gates,
        "w_h": params["W_h"],
        "b_h": params["b_h"].reshape(1, O),
    }


def lstm_forward(x, h, c, packed):
    """One LSTM step. x:[B,I], h:[B,H], c:[B,H] -> (log_probs[B,O], h_new, c_new)."""
    B = x.shape[0]
    H = c.shape[1]
    O = packed["w_h"].shape[1]
    # Lane-dense output slab width (multiple of 128 lanes).
    slab_w = pl.cdiv(O + 2 * H, 128) * 128

    # (2) fuse input and recurrent projections into one contraction operand.
    xh = jnp.concatenate([x, h], axis=1)

    inputs = (
        xh, c,
        packed["w_gates"], packed["b_gates"],
        packed["w_h"], packed["b_h"],
    )

    # (9) whole-array VMEM residency; no grid, no dummy index_maps.
    in_specs = [
        pl.BlockSpec(memory_space=pltpu.MemorySpace.VMEM) for _ in inputs
    ]
    out_spec = pl.BlockSpec(memory_space=pltpu.MemorySpace.VMEM)

    out = pl.pallas_call(
        _lstm_step_kernel,
        out_shape=jax.ShapeDtypeStruct((B, slab_w), jnp.float32),
        in_specs=in_specs,
        out_specs=out_spec,
        compiler_params=pltpu.CompilerParams(
            vmem_limit_bytes=16 * 1024 * 1024),
    )(*inputs)

    log_probs = out[:, :O]
    h_new = out[:, O:O + H]
    c_new = out[:, O + H:O + 2 * H]
    return log_probs, h_new, c_new


def lstm_forward_ref(x, h, c, params):
    """Pure-JAX reference mirroring the PyTorch module exactly."""
    sig = jax.nn.sigmoid
    f = sig(x @ params["W_f"] + h @ params["U_f"] + params["b_f"])
    i = sig(x @ params["W_i"] + h @ params["U_i"] + params["b_i"])
    ct = jnp.tanh(x @ params["W_c"] + h @ params["U_c"] + params["b_c"])
    o = sig(x @ params["W_o"] + h @ params["U_o"] + params["b_o"])
    c_new = f * c + i * ct
    h_new = o * jnp.tanh(c_new)
    logits = h_new @ params["W_h"] + params["b_h"]
    return jax.nn.log_softmax(logits, axis=1), h_new, c_new


if __name__ == "__main__":
    # Small deterministic setup: batch=8, input_size=16, hidden=32, output=16.
    # (hidden=32 -> 4H=128: the packed gate matmul exactly fills one vreg.)
    B, I, H, O = 8, 16, 32, 16
    key = jax.random.PRNGKey(0)
    keys = jax.random.split(key, 20)

    params = {
        "W_f": jax.random.normal(keys[0], (I, H), jnp.float32),
        "U_f": jax.random.normal(keys[1], (H, H), jnp.float32),
        "b_f": jax.random.normal(keys[2], (H,), jnp.float32),
        "W_i": jax.random.normal(keys[3], (I, H), jnp.float32),
        "U_i": jax.random.normal(keys[4], (H, H), jnp.float32),
        "b_i": jax.random.normal(keys[5], (H,), jnp.float32),
        "W_c": jax.random.normal(keys[6], (I, H), jnp.float32),
        "U_c": jax.random.normal(keys[7], (H, H), jnp.float32),
        "b_c": jax.random.normal(keys[8], (H,), jnp.float32),
        "W_o": jax.random.normal(keys[9], (I, H), jnp.float32),
        "U_o": jax.random.normal(keys[10], (H, H), jnp.float32),
        "b_o": jax.random.normal(keys[11], (H,), jnp.float32),
        "W_h": jax.random.normal(keys[12], (H, O), jnp.float32),
        "b_h": jax.random.normal(keys[13], (O,), jnp.float32),
    }

    x = jax.random.normal(keys[14], (B, I), jnp.float32)
    h0 = jax.random.normal(keys[15], (B, H), jnp.float32)
    c0 = jax.random.normal(keys[16], (B, H), jnp.float32)

    packed = pack_lstm_params(params)

    out, h1, c1 = lstm_forward(x, h0, c0, packed)
    jax.block_until_ready((out, h1, c1))

    ref_out, ref_h1, ref_c1 = lstm_forward_ref(x, h0, c0, params)
    # Tolerances account for the different (fused) matmul accumulation order.
    assert jnp.allclose(out, ref_out, atol=1e-4, rtol=1e-4)
    assert jnp.allclose(h1, ref_h1, atol=1e-4, rtol=1e-4)
    assert jnp.allclose(c1, ref_c1, atol=1e-4, rtol=1e-4)

    print("KERNEL_OK")
</pallas_src>

<mosaic_0001>
module attributes {stable_mosaic.version = 11 : i64} {
  func.func @_lstm_step_kernel(%arg0: memref<8x48xf32, #tpu.memory_space<vmem>>, %arg1: memref<8x32xf32, #tpu.memory_space<vmem>>, %arg2: memref<48x128xf32, #tpu.memory_space<vmem>>, %arg3: memref<1x128xf32, #tpu.memory_space<vmem>>, %arg4: memref<32x16xf32, #tpu.memory_space<vmem>>, %arg5: memref<1x16xf32, #tpu.memory_space<vmem>>, %arg6: memref<8x128xf32, #tpu.memory_space<vmem>>) attributes {dimension_semantics = [], scalar_prefetch = 0 : i64, scratch_operands = 0 : i64, tpu.core_type = #tpu.core_type<tc>} {
    %c0 = arith.constant 0 : index
    %c0_0 = arith.constant 0 : index
    %0 = vector.load %arg0[%c0, %c0_0] : memref<8x48xf32, #tpu.memory_space<vmem>>, vector<8x48xf32>
    %c0_1 = arith.constant 0 : index
    %c0_2 = arith.constant 0 : index
    %1 = vector.load %arg1[%c0_1, %c0_2] : memref<8x32xf32, #tpu.memory_space<vmem>>, vector<8x32xf32>
    %c0_3 = arith.constant 0 : index
    %c0_4 = arith.constant 0 : index
    %2 = vector.load %arg2[%c0_3, %c0_4] : memref<48x128xf32, #tpu.memory_space<vmem>>, vector<48x128xf32>
    %cst = arith.constant dense<0.000000e+00> : vector<8x128xf32>
    %3 = tpu.matmul %0, %2, %cst {dimension_numbers = #tpu.dot_dimension_numbers<[1], [0], [0], [1], [0, 0, 1, 1], [], []>} : vector<8x48xf32>, vector<48x128xf32>, vector<8x128xf32> -> vector<8x128xf32>
    %c0_5 = arith.constant 0 : index
    %c0_6 = arith.constant 0 : index
    %4 = vector.load %arg3[%c0_5, %c0_6] : memref<1x128xf32, #tpu.memory_space<vmem>>, vector<1x128xf32>
    %5 = vector.broadcast %4 : vector<1x128xf32> to vector<8x128xf32>
    %6 = arith.addf %3, %5 : vector<8x128xf32>
    %7 = tpu.iota {dimensions = array<i32: 1>} : vector<8x128xi32>
    %c64_i32 = arith.constant 64 : i32
    %8 = vector.broadcast %c64_i32 : i32 to vector<8x128xi32>
    %9 = arith.cmpi sge, %7, %8 : vector<8x128xi32>
    %c96_i32 = arith.constant 96 : i32
    %10 = vector.broadcast %c96_i32 : i32 to vector<8x128xi32>
    %11 = arith.cmpi slt, %7, %10 : vector<8x128xi32>
    %12 = arith.andi %9, %11 : vector<8x128xi1>
    %13 = math.tanh %6 : vector<8x128xf32>
    %14 = arith.negf %6 : vector<8x128xf32>
    %15 = math.exp %14 : vector<8x128xf32>
    %cst_7 = arith.constant 1.000000e+00 : f32
    %16 = vector.broadcast %cst_7 : f32 to vector<8x128xf32>
    %17 = arith.addf %16, %15 : vector<8x128xf32>
    %18 = arith.divf %16, %17 : vector<8x128xf32>
    %19 = arith.select %12, %13, %18 : vector<8x128xi1>, vector<8x128xf32>
    %20 = vector.extract_strided_slice %19 {offsets = [0, 0], sizes = [8, 32], strides = [1, 1]} : vector<8x128xf32> to vector<8x32xf32>
    %21 = vector.extract_strided_slice %19 {offsets = [0, 32], sizes = [8, 32], strides = [1, 1]} : vector<8x128xf32> to vector<8x32xf32>
    %22 = vector.extract_strided_slice %19 {offsets = [0, 64], sizes = [8, 32], strides = [1, 1]} : vector<8x128xf32> to vector<8x32xf32>
    %23 = vector.extract_strided_slice %19 {offsets = [0, 96], sizes = [8, 32], strides = [1, 1]} : vector<8x128xf32> to vector<8x32xf32>
    %24 = arith.mulf %20, %1 : vector<8x32xf32>
    %25 = arith.mulf %21, %22 : vector<8x32xf32>
    %26 = arith.addf %24, %25 : vector<8x32xf32>
    %27 = math.tanh %26 : vector<8x32xf32>
    %28 = arith.mulf %23, %27 : vector<8x32xf32>
    %c0_8 = arith.constant 0 : index
    %c0_9 = arith.constant 0 : index
    %29 = vector.load %arg4[%c0_8, %c0_9] : memref<32x16xf32, #tpu.memory_space<vmem>>, vector<32x16xf32>
    %cst_10 = arith.constant dense<0.000000e+00> : vector<8x16xf32>
    %30 = tpu.matmul %28, %29, %cst_10 {dimension_numbers = #tpu.dot_dimension_numbers<[1], [0], [0], [1], [0, 0, 1, 1], [], []>} : vector<8x32xf32>, vector<32x16xf32>, vector<8x16xf32> -> vector<8x16xf32>
    %c0_11 = arith.constant 0 : index
    %c0_12 = arith.constant 0 : index
    %31 = vector.load %arg5[%c0_11, %c0_12] : memref<1x16xf32, #tpu.memory_space<vmem>>, vector<1x16xf32>
    %32 = vector.broadcast %31 : vector<1x16xf32> to vector<8x16xf32>
    %33 = arith.addf %30, %32 : vector<8x16xf32>
    %cst_13 = arith.constant dense<0xFF800000> : vector<8xf32>
    %34 = vector.multi_reduction <maximumf>, %33, %cst_13 [1] : vector<8x16xf32> to vector<8xf32>
    %35 = vector.shape_cast %34 : vector<8xf32> to vector<8x1xf32>
    %36 = vector.broadcast %35 : vector<8x1xf32> to vector<8x16xf32>
    %37 = arith.subf %33, %36 : vector<8x16xf32>
    %38 = math.exp %37 : vector<8x16xf32>
    %cst_14 = arith.constant dense<0.000000e+00> : vector<8xf32>
    %39 = vector.multi_reduction <add>, %38, %cst_14 [1] : vector<8x16xf32> to vector<8xf32>
    %40 = vector.shape_cast %39 : vector<8xf32> to vector<8x1xf32>
    %41 = math.log %40 : vector<8x1xf32>
    %42 = vector.broadcast %41 : vector<8x1xf32> to vector<8x16xf32>
    %43 = arith.subf %37, %42 : vector<8x16xf32>
    %cst_15 = arith.constant 0.000000e+00 : f32
    %44 = vector.broadcast %cst_15 : f32 to vector<8x48xf32>
    %45 = tpu.concatenate %43, %28, %26, %44 in 1 : vector<8x16xf32>, vector<8x32xf32>, vector<8x32xf32>, vector<8x48xf32> -> vector<8x128xf32>
    %c0_16 = arith.constant 0 : index
    %c0_17 = arith.constant 0 : index
    %46 = vector.load %arg6[%c0_16, %c0_17] : memref<8x128xf32, #tpu.memory_space<vmem>>, vector<8x128xf32>
    tpu.vector_store %arg6[%c0_16, %c0_17], %45 {strides = array<i32>} : memref<8x128xf32, #tpu.memory_space<vmem>>, vector<8x128xf32>,
    return
  }
}

</mosaic_0001>

<llo_original>
// kernel: tpu_custom_call.1
$region0: #{tpu_custom_call.1}
  #allocation0 [shape = 'u32[]', space=smem, size = 0x4, offset = 0x4, fixed_abs, tag = 'smem constant byte address 0x4 - core index']
  #allocation1 [shape = 'u32[72,128]{1,0:T(1,128)}', space=vmem, size = 0x9000, scoped, tag = 'internal scratch']
  %s0 = inlined_call_operand.hbm [shape: f32[8,48], index: 0, kind: input, shape index: {}]
  %s1 = inlined_call_operand.hbm [shape: f32[8,32], index: 1, kind: input, shape index: {}]
  %s2 = inlined_call_operand.vmem [shape: f32[48,128], index: 2, kind: input, shape index: {}]
  %s3 = inlined_call_operand.vmem [shape: f32[1,128], index: 3, kind: input, shape index: {}]
  %s4 = inlined_call_operand.vmem [shape: f32[32,16], index: 4, kind: input, shape index: {}]
  %s5 = inlined_call_operand.vmem [shape: f32[1,16], index: 5, kind: input, shape index: {}]
  %s6 = inlined_call_operand.hbm [shape: f32[8,128], index: 6, kind: output, shape index: {}]
  %s7 = sld [smem:[#allocation0]]
  $region42: #{tpu_custom_call.1} parent=0
    _
  %s9 = ssub.s32 1, %s7
  %s10 = scalar_select 0, %s9, %s7
  $region1: #{tpu_custom_call.1} parent=0
    #allocation2 [shape = 'u8[4096]{0}', space=vmem, size = 0x1000, scoped, tag = 'input window, operand 0, single buffered']
    #allocation3 [shape = 's32[1]{0}', space=sflag, size = 0x4, scoped, tag = 'scoped memory for tpu_custom_call.1']
    #allocation4 [shape = 's32[1]{0}', space=sflag, size = 0x4, scoped, tag = 'scoped memory for tpu_custom_call.1']
    #allocation5 [shape = 'u8[4096]{0}', space=vmem, size = 0x1000, scoped, tag = 'input window, operand 1, single buffered']
    #allocation6 [shape = 's32[1]{0}', space=sflag, size = 0x4, scoped, tag = 'scoped memory for tpu_custom_call.1']
    #allocation7 [shape = 'u8[4096]{0}', space=vmem, size = 0x1000, scoped, tag = 'output window, operand 0, single buffered']
    %11 = vsyncpa [#allocation3], 0
    %12 = vsyncpa [#allocation6], 0
    %13 = vsyncpa [#allocation4], 0
    // Predicated region
    $region2: #{tpu_custom_call.1} parent=1 // pred_check
      _
    $region3: #{tpu_custom_call.1} parent=1 // pred_check_branch
      %15 = sbr.rel (0) target = $region5
    $region4: #{tpu_custom_call.1} parent=1 // pred_region
      %17 = vsyncadd [#allocation3], 0
      %s19 = sshll.u32 %s0, 4
      %s20 = int_to_ptr.hbm [resolvable:$true] %s19
      %s21 = sshll.u32 [#allocation2], 4
      %s22 = int_to_ptr.vmem [resolvable:$true] %s21
      %24 = dma.hbm_to_vmem [thread:$0]  %s20, 128, %s22, [#allocation3]
    $region5: #{tpu_custom_call.1} parent=1 // pred_fallthru
      _
    // Predicated region
    $region6: #{tpu_custom_call.1} parent=1 // pred_check
      _
    $region7: #{tpu_custom_call.1} parent=1 // pred_check_branch
      %26 = sbr.rel (0) target = $region9
    $region8: #{tpu_custom_call.1} parent=1 // pred_region
      %28 = vsyncadd [#allocation6], 0
      %s30 = sshll.u32 %s1, 4
      %s31 = int_to_ptr.hbm [resolvable:$true] %s30
      %s32 = sshll.u32 [#allocation5], 4
      %s33 = int_to_ptr.vmem [resolvable:$true] %s32
      %35 = dma.hbm_to_vmem [thread:$0]  %s31, 128, %s33, [#allocation6]
    $region9: #{tpu_custom_call.1} parent=1 // pred_fallthru
      _
    // Predicated region
    $region10: #{tpu_custom_call.1} parent=1 // pred_check
      _
    $region11: #{tpu_custom_call.1} parent=1 // pred_check_branch
      %37 = sbr.rel (0) target = $region13
    $region12: #{tpu_custom_call.1} parent=1 // pred_region
      _
    $region13: #{tpu_custom_call.1} parent=1 // pred_fallthru
      _
    // Predicated region
    $region14: #{tpu_custom_call.1} parent=1 // pred_check
      _
    $region15: #{tpu_custom_call.1} parent=1 // pred_check_branch
      %39 = sbr.rel (0) target = $region17
    $region16: #{tpu_custom_call.1} parent=1 // pred_region
      _
    $region17: #{tpu_custom_call.1} parent=1 // pred_fallthru
      _
    // Predicated region
    $region18: #{tpu_custom_call.1} parent=1 // pred_check
      _
    $region19: #{tpu_custom_call.1} parent=1 // pred_check_branch
      %41 = sbr.rel (0) target = $region21
    $region20: #{tpu_custom_call.1} parent=1 // pred_region
      _
    $region21: #{tpu_custom_call.1} parent=1 // pred_fallthru
      _
    // Predicated region
    $region22: #{tpu_custom_call.1} parent=1 // pred_check
      _
    $region23: #{tpu_custom_call.1} parent=1 // pred_check_branch
      %43 = sbr.rel (0) target = $region25
    $region24: #{tpu_custom_call.1} parent=1 // pred_region
      _
    $region25: #{tpu_custom_call.1} parent=1 // pred_fallthru
      _
    // Predicated region
    $region26: #{tpu_custom_call.1} parent=1 // pred_check
      _
    $region27: #{tpu_custom_call.1} parent=1 // pred_check_branch
      %45 = sbr.rel (0) target = $region29
    $region28: #{tpu_custom_call.1} parent=1 // pred_region
      %47 = dma.done [#allocation3], 128
    $region29: #{tpu_custom_call.1} parent=1 // pred_fallthru
      _
    // Predicated region
    $region30: #{tpu_custom_call.1} parent=1 // pred_check
      _
    $region31: #{tpu_custom_call.1} parent=1 // pred_check_branch
      %49 = sbr.rel (0) target = $region33
    $region32: #{tpu_custom_call.1} parent=1 // pred_region
      %51 = dma.done [#allocation6], 128
    $region33: #{tpu_custom_call.1} parent=1 // pred_fallthru
      _
    %v52 = vld [vmem:[#allocation2] sm:$0xff]
    %v53 = vld [vmem:[#allocation5] sm:$0xff]
    %v54 = vld [vmem:[%s2] sm:$0xff]
    %v55 = vld [vmem:[%s2 + $0x8] sm:$0xff]
    %v56 = vld [vmem:[%s2 + $0x10] sm:$0xff]
    %v57 = vld [vmem:[%s2 + $0x18] sm:$0xff]
    %v58 = vld [vmem:[%s2 + $0x20] sm:$0xff]
    %v59 = vld [vmem:[%s2 + $0x28] sm:$0xff]
    %v60 = vld [vmem:[%s3] sm:$0x1]
    %v62 = vperm.slane %v60, 0
    %vm64 = vcmask 392192
    %v66 = vsel %vm64, %v52, 0
    %68 = vmatpush.msra.mxu0 0.0
    %69 = vmatpush.msra.mxu0 0.0
    %70 = vmatpush.msra.mxu0 0.0
    %71 = vmatpush.msra.mxu0 0.0
    %72 = vmatpush.msra.mxu0 0.0
    %73 = vmatpush.msra.mxu0 0.0
    %74 = vmatpush.msra.mxu0 0.0
    %75 = vmatpush.msra.mxu0 0.0
    %76 = vmatpush.msra.mxu0 0.0
    %77 = vmatpush.msra.mxu0 0.0
    %78 = vmatpush.msra.mxu0 %v59
    %79 = vmatpush.msra.mxu0 %v58
    %80 = vmatpush.msra.mxu0 %v57
    %81 = vmatpush.msra.mxu0 %v56
    %82 = vmatpush.msra.mxu0 %v55
    %83 = vmatpush.msra.mxu0 %v54
    %84 = vmatmul.f32.gmra.mxu0 %v66
    %v85 = vpop.f32.mrf.mxu0
    %v86 = vadd.f32 %v62, %v85
    %87 = vdwg.mxu0
    %v88 = vlaneseq
    %v89 = vand.u32 %v88, 127
    %vm90 = vcmp.ge.s32.totalorder %v89, 64
    %vm91 = vcmp.lt.s32.totalorder %v89, 96
    %vm92 = vmand %vm90, %vm91
    %v93 = vtanh.pop %v86
    %v94 = vxor.u32 %v86, 2147483648
    %v95 = vmul.f32 %v94, 1.442695
    %v96 = vpow.pop %v95
    %v97 = vadd.f32 %v96, 1.0
    %v98 = vrcp.pop %v97
    %v99 = vmul.f32 %v97, %v98
    %v100 = vsub.f32 1.0, %v99
    %v101 = vmul.f32 %v98, %v100
    %v102 = vadd.f32 %v98, %v101
    %vm103 = vweird.f32 %v97
    %vm104 = vweird.f32 %v98
    %vm105 = vmor %vm103, %vm104
    %v106 = vsel %vm105, %v98, %v102
    %v107 = vand.u32 2147483647, %v97
    %vm108 = vcmp.eq.f32.partialorder %v107, 8.507059e+37
    %v109 = vand.u32 %v97, 2147483648
    %v110 = vor.u32 1.1754944e-38, %v109
    %v111 = vsel %vm108, %v110, %v106
    %v112 = vmul.f32 1.0, %v111
    %v113 = vsel %vm92, %v93, %v112
    %v114 = vmul.f32 %v113, %v53
    %116 = vrot.lane.b32.xlu0 %v113, 96
    %v117 = vpop.permute.xlu0 %116
    %v119 = vmul.f32 %v113, %v117
    %121 = vrot.lane.b32.xlu0 %v119, 96
    %v122 = vpop.permute.xlu0 %121
    %v124 = vadd.f32 %v114, %v122
    %v125 = vtanh.pop %v124
    %127 = vrot.lane.b32.xlu0 %v125, 96
    %v128 = vpop.permute.xlu0 %127
    %v130 = vmul.f32 %v113, %v128
    %v131 = vld [vmem:[%s4] sm:$0xff]
    %v132 = vld [vmem:[%s4 + $0x8] sm:$0xff]
    %v133 = vld [vmem:[%s4 + $0x10] sm:$0xff]
    %v134 = vld [vmem:[%s4 + $0x18] sm:$0xff]
    %v135 = vld [vmem:[%s5] sm:$0x1]
    %v137 = vperm.slane %v135, 0
    %140 = vrot.lane.b32.xlu0 %v130, 32
    %v141 = vpop.permute.xlu0 %140
    %vm142 = vcmask 261120
    %v143 = vsel %vm142, %v141, 0
    %145 = vmatpush.msra.mxu0 0.0
    %146 = vmatpush.msra.mxu0 0.0
    %147 = vmatpush.msra.mxu0 0.0
    %148 = vmatpush.msra.mxu0 0.0
    %149 = vmatpush.msra.mxu0 0.0
    %150 = vmatpush.msra.mxu0 0.0
    %151 = vmatpush.msra.mxu0 0.0
    %152 = vmatpush.msra.mxu0 0.0
    %153 = vmatpush.msra.mxu0 0.0
    %154 = vmatpush.msra.mxu0 0.0
    %155 = vmatpush.msra.mxu0 0.0
    %156 = vmatpush.msra.mxu0 0.0
    %157 = vmatpush.msra.mxu0 %v134
    %158 = vmatpush.msra.mxu0 %v133
    %159 = vmatpush.msra.mxu0 %v132
    %160 = vmatpush.msra.mxu0 %v131
    %161 = vmatmul.f32.gmra.mxu0 %v143
    %v162 = vpop.f32.mrf.mxu0
    %v163 = vadd.f32 %v137, %v162
    %164 = vdwg.mxu0
    %vm165 = vcmask 130048
    %v166 = vsel %vm165, %v163, -inf
    %167 = vmax.xlane.f32.xlu0 %v166
    %v168 = vpop.xlane.xlu0 %167
    %v169 = vsub.f32 %v163, %v168
    %v170 = vmul.f32 %v169, 1.442695
    %v171 = vpow.pop %v170
    %v172 = vsel %vm165, %v171, 0.0
    %173 = vadd.xlane.f32.xlu0 %v172
    %v174 = vpop.xlane.xlu0 %173
    %v175 = vlog2.pop %v174
    %v176 = vmul.f32 %v175, 0.6931472
    %v177 = vsub.f32 %v169, %v176
    %178 = vrot.lane.b32.xlu0 %v130, 48
    %v179 = vpop.permute.xlu0 %178
    %182 = vrot.lane.b32.xlu0 %v124, 48
    %v183 = vpop.permute.xlu0 %182
    %v185 = vsel %vm165, %v177, %v179
    %v186 = vsel %vm64, %v185, %v183
    %vm187 = vcmask 654336
    %v188 = vsel %vm187, %v186, 0.0
    %189 = vst [vmem:[#allocation7] sm:$0xff] %v188
    // Predicated region
    $region34: #{tpu_custom_call.1} parent=1 // pred_check
      _
    $region35: #{tpu_custom_call.1} parent=1 // pred_check_branch
      %191 = sbr.rel (0) target = $region37
    $region36: #{tpu_custom_call.1} parent=1 // pred_region
      %193 = vsyncadd [#allocation4], 0
      %s195 = sshll.u32 [#allocation7], 4
      %s196 = int_to_ptr.vmem [resolvable:$true] %s195
      %s197 = sshll.u32 %s6, 4
      %s198 = int_to_ptr.hbm [resolvable:$true] %s197
      %200 = dma.vmem_to_hbm [thread:$0]  %s196, 128, %s198, [#allocation4]
    $region37: #{tpu_custom_call.1} parent=1 // pred_fallthru
      _
    // Predicated region
    $region38: #{tpu_custom_call.1} parent=1 // pred_check
      _
    $region39: #{tpu_custom_call.1} parent=1 // pred_check_branch
      %202 = sbr.rel (0) target = $region41
    $region40: #{tpu_custom_call.1} parent=1 // pred_region
      %204 = dma.done [#allocation4], 128
    $region41: #{tpu_custom_call.1} parent=1 // pred_fallthru
      _
    %205 = vsyncpa [#allocation3], 1
    %206 = vsyncpa [#allocation6], 1
    %207 = vsyncpa [#allocation4], 1

</llo_original>
